<compile_context>
chip_gen: v7x
topology: tpu7x:2x2x1
jax: 0.10.0
libtpu: 0.0.40
codegen_flags: <defaults>
</compile_context>

<pallas_src>
import jax
import jax.numpy as jnp
from jax.experimental import pallas as pl
from jax.experimental.pallas import tpu as pltpu


def gru_head_kernel(x_ref, wih_ref, gib_ref, whh_ref, bhhn_ref,
                    wblk_ref, bout_ref, out_ref):
    """Single-invocation kernel; whole (tiny) problem resident in VMEM.

    x_ref   : (T, B, F)        original (un-tiled) input sequence
    wih_ref : (F, 3H)          GRU input weights, transposed, gate order [r,z,n]
    gib_ref : (1, 3H)          folded bias: [b_ih_r+b_hh_r, b_ih_z+b_hh_z, b_ih_n]
    whh_ref : (3, H, H)        GRU hidden weights, pre-split per gate, transposed
    bhhn_ref: (1, H)           b_hh_n (must stay inside the r*(...) term)
    wblk_ref: (M*H, M*states)  block-diagonal stack of the M linear weights^T
    bout_ref: (1, M*states)    concatenated linear biases
    out_ref : (B, M*states)    lane-dense output slab
    """
    T, B, F = x_ref.shape
    H = whh_ref.shape[1]
    MH, MS = wblk_ref.shape
    M = MH // H

    # ---- Hoisted input projection: one MXU dispatch for all unique steps ----
    x2d = x_ref[...].reshape(T * B, F).astype(jnp.float32)
    gi = jnp.dot(x2d, wih_ref[...], preferred_element_type=jnp.float32) + gib_ref[...]
    gi = gi.reshape(T, B, 3 * H)
    # One-time gate slices (off the serial critical path).
    gi_r = gi[:, :, 0:H]
    gi_z = gi[:, :, H:2 * H]
    gi_n = gi[:, :, 2 * H:]

    whh_r = whh_ref[0]
    whh_z = whh_ref[1]
    whh_n = whh_ref[2]
    bhh_n = bhhn_ref[...]

    # ---- Serial GRU recurrence: only the first M steps are ever consumed ----
    h = jnp.zeros((B, H), dtype=jnp.float32)
    hs = []
    for t in range(M):                      # static, small trip count -> unrolled
        u = t % T                           # repeated sequence: x_rep[t] == x[t % T]
        gh_r = jnp.dot(h, whh_r, preferred_element_type=jnp.float32)
        gh_z = jnp.dot(h, whh_z, preferred_element_type=jnp.float32)
        gh_n = jnp.dot(h, whh_n, preferred_element_type=jnp.float32) + bhh_n
        r = jax.nn.sigmoid(gi_r[u] + gh_r)
        z = jax.nn.sigmoid(gi_z[u] + gh_z)
        n = jnp.tanh(gi_n[u] + r * gh_n)
        h = (1.0 - z) * n + z * h
        hs.append(h)

    # ---- All M linears fused into one block-diagonal matmul + single store ----
    h_cat = jnp.concatenate(hs, axis=1)     # (B, M*H)
    out_ref[...] = (jnp.dot(h_cat, wblk_ref[...],
                            preferred_element_type=jnp.float32)
                    + bout_ref[...]).astype(out_ref.dtype)


def prepare_gru_head_params(params):
    """One-time constant re-layout (do NOT call per forward)."""
    w_ih, w_hh, b_ih, b_hh, w_lin, b_lin = params
    M, states, _ = w_lin.shape
    H = w_hh.shape[1]

    wih_T = jnp.transpose(w_ih).astype(jnp.float32)                  # (F, 3H)
    # Fold b_hh into the r/z gate biases (they add linearly there); keep b_hh_n
    # separate because it lives inside the r * (h@W_hn^T + b_hn) term.
    gi_bias = jnp.concatenate(
        [b_ih[:2 * H] + b_hh[:2 * H], b_ih[2 * H:]]).reshape(1, 3 * H)
    whh_s = jnp.stack([jnp.transpose(w_hh[0:H]),
                       jnp.transpose(w_hh[H:2 * H]),
                       jnp.transpose(w_hh[2 * H:])], axis=0)          # (3, H, H)
    bhh_n = b_hh[2 * H:].reshape(1, H)

    # Block-diagonal stack of the M per-module linear weights (transposed):
    # out[:, m*S:(m+1)*S] = h_m @ w_lin[m].T + b_lin[m]
    w_blk = jnp.zeros((M * H, M * states), jnp.float32)
    for m in range(M):
        w_blk = w_blk.at[m * H:(m + 1) * H,
                         m * states:(m + 1) * states].set(jnp.transpose(w_lin[m]))
    b_out = b_lin.reshape(1, M * states)

    return (wih_T, gi_bias, whh_s, bhh_n, w_blk, b_out, M, states, H)


def gru_head_forward(x, prepped):
    """x: (T, B, F) float32. Returns (B, states, modules) like the PyTorch module."""
    wih_T, gi_bias, whh_s, bhh_n, w_blk, b_out, M, states, H = prepped
    T, B, F = x.shape

    out2d = pl.pallas_call(
        gru_head_kernel,
        out_shape=jax.ShapeDtypeStruct((B, M * states), jnp.float32),
        in_specs=[pl.BlockSpec(memory_space=pltpu.MemorySpace.VMEM)] * 7,
        out_specs=pl.BlockSpec(memory_space=pltpu.MemorySpace.VMEM),
    )(x, wih_T, gi_bias, whh_s, bhh_n, w_blk, b_out)

    # Free layout plumbing in the wrapper: (B, M*states) -> (B, states, M)
    return jnp.transpose(out2d.reshape(B, M, states), (0, 2, 1))


def gru_head_ref(x, params):
    """Pure-JAX reference mirroring the PyTorch forward exactly."""
    w_ih, w_hh, b_ih, b_hh, w_lin, b_lin = params
    M = w_lin.shape[0]
    H = w_hh.shape[1]
    x_rep = jnp.tile(x, (M, 1, 1))
    S, B, F = x_rep.shape
    h = jnp.zeros((B, H), jnp.float32)
    hs = []
    for t in range(S):
        gi = x_rep[t] @ w_ih.T + b_ih
        gh = h @ w_hh.T + b_hh
        r = jax.nn.sigmoid(gi[:, :H] + gh[:, :H])
        z = jax.nn.sigmoid(gi[:, H:2 * H] + gh[:, H:2 * H])
        n = jnp.tanh(gi[:, 2 * H:] + r * gh[:, 2 * H:])
        h = (1.0 - z) * n + z * h
        hs.append(h)
    outs = [hs[m] @ w_lin[m].T + b_lin[m] for m in range(M)]
    return jnp.stack(outs, -1)


if __name__ == "__main__":
    features, modules, states = 32, 4, 2
    batch, seq = 4, 1                        # GRUHead feeds a length-1 sequence per step
    H = features                             # unidirectional: hidden = features // 1

    key = jax.random.PRNGKey(0)
    ks = jax.random.split(key, 7)
    s_gru = 1.0 / (H ** 0.5)                 # PyTorch GRU default init scale
    s_lin = 1.0 / (features ** 0.5)          # PyTorch Linear default init scale

    w_ih = jax.random.uniform(ks[0], (3 * H, features), jnp.float32, -s_gru, s_gru)
    w_hh = jax.random.uniform(ks[1], (3 * H, H), jnp.float32, -s_gru, s_gru)
    b_ih = jax.random.uniform(ks[2], (3 * H,), jnp.float32, -s_gru, s_gru)
    b_hh = jax.random.uniform(ks[3], (3 * H,), jnp.float32, -s_gru, s_gru)
    w_lin = jax.random.uniform(ks[4], (modules, states, features), jnp.float32, -s_lin, s_lin)
    b_lin = jax.random.uniform(ks[5], (modules, states), jnp.float32, -s_lin, s_lin)
    x = jax.random.normal(ks[6], (seq, batch, features), jnp.float32)

    params = (w_ih, w_hh, b_ih, b_hh, w_lin, b_lin)
    prepped = prepare_gru_head_params(params)    # constant re-layout, done once

    out = gru_head_forward(x, prepped)
    out = jax.block_until_ready(out)

    ref = gru_head_ref(x, params)
    assert out.shape == (batch, states, modules), out.shape
    assert jnp.allclose(out, ref, atol=1e-4, rtol=1e-4), \
        float(jnp.max(jnp.abs(out - ref)))

    print("KERNEL_OK")
</pallas_src>

<mosaic_0001>
module attributes {stable_mosaic.version = 11 : i64} {
  func.func @gru_head_kernel(%arg0: memref<1x4x32xf32, #tpu.memory_space<vmem>>, %arg1: memref<32x96xf32, #tpu.memory_space<vmem>>, %arg2: memref<1x96xf32, #tpu.memory_space<vmem>>, %arg3: memref<3x32x32xf32, #tpu.memory_space<vmem>>, %arg4: memref<1x32xf32, #tpu.memory_space<vmem>>, %arg5: memref<128x8xf32, #tpu.memory_space<vmem>>, %arg6: memref<1x8xf32, #tpu.memory_space<vmem>>, %arg7: memref<4x8xf32, #tpu.memory_space<vmem>>) attributes {dimension_semantics = [], scalar_prefetch = 0 : i64, scratch_operands = 0 : i64, tpu.core_type = #tpu.core_type<tc>} {
    %c0 = arith.constant 0 : index
    %c0_0 = arith.constant 0 : index
    %c0_1 = arith.constant 0 : index
    %0 = vector.load %arg0[%c0, %c0_0, %c0_1] : memref<1x4x32xf32, #tpu.memory_space<vmem>>, vector<1x4x32xf32>
    %1 = vector.shape_cast %0 : vector<1x4x32xf32> to vector<4x32xf32>
    %c0_2 = arith.constant 0 : index
    %c0_3 = arith.constant 0 : index
    %2 = vector.load %arg1[%c0_2, %c0_3] : memref<32x96xf32, #tpu.memory_space<vmem>>, vector<32x96xf32>
    %cst = arith.constant dense<0.000000e+00> : vector<4x96xf32>
    %3 = tpu.matmul %1, %2, %cst {dimension_numbers = #tpu.dot_dimension_numbers<[1], [0], [0], [1], [0, 0, 1, 1], [], []>} : vector<4x32xf32>, vector<32x96xf32>, vector<4x96xf32> -> vector<4x96xf32>
    %c0_4 = arith.constant 0 : index
    %c0_5 = arith.constant 0 : index
    %4 = vector.load %arg2[%c0_4, %c0_5] : memref<1x96xf32, #tpu.memory_space<vmem>>, vector<1x96xf32>
    %5 = vector.broadcast %4 : vector<1x96xf32> to vector<4x96xf32>
    %6 = arith.addf %3, %5 : vector<4x96xf32>
    %7 = vector.shape_cast %6 : vector<4x96xf32> to vector<1x4x96xf32>
    %8 = vector.extract_strided_slice %7 {offsets = [0, 0, 0], sizes = [1, 4, 32], strides = [1, 1, 1]} : vector<1x4x96xf32> to vector<1x4x32xf32>
    %9 = vector.extract_strided_slice %7 {offsets = [0, 0, 32], sizes = [1, 4, 32], strides = [1, 1, 1]} : vector<1x4x96xf32> to vector<1x4x32xf32>
    %10 = vector.extract_strided_slice %7 {offsets = [0, 0, 64], sizes = [1, 4, 32], strides = [1, 1, 1]} : vector<1x4x96xf32> to vector<1x4x32xf32>
    %c0_6 = arith.constant 0 : index
    %c0_7 = arith.constant 0 : index
    %c0_8 = arith.constant 0 : index
    %11 = vector.load %arg3[%c0_6, %c0_7, %c0_8] : memref<3x32x32xf32, #tpu.memory_space<vmem>>, vector<1x32x32xf32>
    %12 = vector.shape_cast %11 : vector<1x32x32xf32> to vector<32x32xf32>
    %c1 = arith.constant 1 : index
    %c0_9 = arith.constant 0 : index
    %c0_10 = arith.constant 0 : index
    %13 = vector.load %arg3[%c1, %c0_9, %c0_10] : memref<3x32x32xf32, #tpu.memory_space<vmem>>, vector<1x32x32xf32>
    %14 = vector.shape_cast %13 : vector<1x32x32xf32> to vector<32x32xf32>
    %c2 = arith.constant 2 : index
    %c0_11 = arith.constant 0 : index
    %c0_12 = arith.constant 0 : index
    %15 = vector.load %arg3[%c2, %c0_11, %c0_12] : memref<3x32x32xf32, #tpu.memory_space<vmem>>, vector<1x32x32xf32>
    %16 = vector.shape_cast %15 : vector<1x32x32xf32> to vector<32x32xf32>
    %c0_13 = arith.constant 0 : index
    %c0_14 = arith.constant 0 : index
    %17 = vector.load %arg4[%c0_13, %c0_14] : memref<1x32xf32, #tpu.memory_space<vmem>>, vector<1x32xf32>
    %cst_15 = arith.constant 0.000000e+00 : f32
    %18 = vector.broadcast %cst_15 : f32 to vector<4x32xf32>
    %cst_16 = arith.constant dense<0.000000e+00> : vector<4x32xf32>
    %19 = tpu.matmul %18, %12, %cst_16 {dimension_numbers = #tpu.dot_dimension_numbers<[1], [0], [0], [1], [0, 0, 1, 1], [], []>} : vector<4x32xf32>, vector<32x32xf32>, vector<4x32xf32> -> vector<4x32xf32>
    %cst_17 = arith.constant dense<0.000000e+00> : vector<4x32xf32>
    %20 = tpu.matmul %18, %14, %cst_17 {dimension_numbers = #tpu.dot_dimension_numbers<[1], [0], [0], [1], [0, 0, 1, 1], [], []>} : vector<4x32xf32>, vector<32x32xf32>, vector<4x32xf32> -> vector<4x32xf32>
    %cst_18 = arith.constant dense<0.000000e+00> : vector<4x32xf32>
    %21 = tpu.matmul %18, %16, %cst_18 {dimension_numbers = #tpu.dot_dimension_numbers<[1], [0], [0], [1], [0, 0, 1, 1], [], []>} : vector<4x32xf32>, vector<32x32xf32>, vector<4x32xf32> -> vector<4x32xf32>
    %22 = vector.broadcast %17 : vector<1x32xf32> to vector<4x32xf32>
    %23 = arith.addf %21, %22 : vector<4x32xf32>
    %24 = vector.shape_cast %8 : vector<1x4x32xf32> to vector<4x32xf32>
    %25 = arith.addf %24, %19 : vector<4x32xf32>
    %26 = arith.negf %25 : vector<4x32xf32>
    %27 = math.exp %26 : vector<4x32xf32>
    %cst_19 = arith.constant 1.000000e+00 : f32
    %28 = vector.broadcast %cst_19 : f32 to vector<4x32xf32>
    %29 = arith.addf %28, %27 : vector<4x32xf32>
    %30 = arith.divf %28, %29 : vector<4x32xf32>
    %31 = vector.shape_cast %9 : vector<1x4x32xf32> to vector<4x32xf32>
    %32 = arith.addf %31, %20 : vector<4x32xf32>
    %33 = arith.negf %32 : vector<4x32xf32>
    %34 = math.exp %33 : vector<4x32xf32>
    %cst_20 = arith.constant 1.000000e+00 : f32
    %35 = vector.broadcast %cst_20 : f32 to vector<4x32xf32>
    %36 = arith.addf %35, %34 : vector<4x32xf32>
    %37 = arith.divf %35, %36 : vector<4x32xf32>
    %38 = vector.shape_cast %10 : vector<1x4x32xf32> to vector<4x32xf32>
    %39 = arith.mulf %30, %23 : vector<4x32xf32>
    %40 = arith.addf %38, %39 : vector<4x32xf32>
    %41 = math.tanh %40 : vector<4x32xf32>
    %cst_21 = arith.constant 1.000000e+00 : f32
    %42 = vector.broadcast %cst_21 : f32 to vector<4x32xf32>
    %43 = arith.subf %42, %37 : vector<4x32xf32>
    %44 = arith.mulf %43, %41 : vector<4x32xf32>
    %45 = arith.mulf %37, %18 : vector<4x32xf32>
    %46 = arith.addf %44, %45 : vector<4x32xf32>
    %cst_22 = arith.constant dense<0.000000e+00> : vector<4x32xf32>
    %47 = tpu.matmul %46, %12, %cst_22 {dimension_numbers = #tpu.dot_dimension_numbers<[1], [0], [0], [1], [0, 0, 1, 1], [], []>} : vector<4x32xf32>, vector<32x32xf32>, vector<4x32xf32> -> vector<4x32xf32>
    %cst_23 = arith.constant dense<0.000000e+00> : vector<4x32xf32>
    %48 = tpu.matmul %46, %14, %cst_23 {dimension_numbers = #tpu.dot_dimension_numbers<[1], [0], [0], [1], [0, 0, 1, 1], [], []>} : vector<4x32xf32>, vector<32x32xf32>, vector<4x32xf32> -> vector<4x32xf32>
    %cst_24 = arith.constant dense<0.000000e+00> : vector<4x32xf32>
    %49 = tpu.matmul %46, %16, %cst_24 {dimension_numbers = #tpu.dot_dimension_numbers<[1], [0], [0], [1], [0, 0, 1, 1], [], []>} : vector<4x32xf32>, vector<32x32xf32>, vector<4x32xf32> -> vector<4x32xf32>
    %50 = vector.broadcast %17 : vector<1x32xf32> to vector<4x32xf32>
    %51 = arith.addf %49, %50 : vector<4x32xf32>
    %52 = vector.shape_cast %8 : vector<1x4x32xf32> to vector<4x32xf32>
    %53 = arith.addf %52, %47 : vector<4x32xf32>
    %54 = arith.negf %53 : vector<4x32xf32>
    %55 = math.exp %54 : vector<4x32xf32>
    %cst_25 = arith.constant 1.000000e+00 : f32
    %56 = vector.broadcast %cst_25 : f32 to vector<4x32xf32>
    %57 = arith.addf %56, %55 : vector<4x32xf32>
    %58 = arith.divf %56, %57 : vector<4x32xf32>
    %59 = vector.shape_cast %9 : vector<1x4x32xf32> to vector<4x32xf32>
    %60 = arith.addf %59, %48 : vector<4x32xf32>
    %61 = arith.negf %60 : vector<4x32xf32>
    %62 = math.exp %61 : vector<4x32xf32>
    %cst_26 = arith.constant 1.000000e+00 : f32
    %63 = vector.broadcast %cst_26 : f32 to vector<4x32xf32>
    %64 = arith.addf %63, %62 : vector<4x32xf32>
    %65 = arith.divf %63, %64 : vector<4x32xf32>
    %66 = vector.shape_cast %10 : vector<1x4x32xf32> to vector<4x32xf32>
    %67 = arith.mulf %58, %51 : vector<4x32xf32>
    %68 = arith.addf %66, %67 : vector<4x32xf32>
    %69 = math.tanh %68 : vector<4x32xf32>
    %cst_27 = arith.constant 1.000000e+00 : f32
    %70 = vector.broadcast %cst_27 : f32 to vector<4x32xf32>
    %71 = arith.subf %70, %65 : vector<4x32xf32>
    %72 = arith.mulf %71, %69 : vector<4x32xf32>
    %73 = arith.mulf %65, %46 : vector<4x32xf32>
    %74 = arith.addf %72, %73 : vector<4x32xf32>
    %cst_28 = arith.constant dense<0.000000e+00> : vector<4x32xf32>
    %75 = tpu.matmul %74, %12, %cst_28 {dimension_numbers = #tpu.dot_dimension_numbers<[1], [0], [0], [1], [0, 0, 1, 1], [], []>} : vector<4x32xf32>, vector<32x32xf32>, vector<4x32xf32> -> vector<4x32xf32>
    %cst_29 = arith.constant dense<0.000000e+00> : vector<4x32xf32>
    %76 = tpu.matmul %74, %14, %cst_29 {dimension_numbers = #tpu.dot_dimension_numbers<[1], [0], [0], [1], [0, 0, 1, 1], [], []>} : vector<4x32xf32>, vector<32x32xf32>, vector<4x32xf32> -> vector<4x32xf32>
    %cst_30 = arith.constant dense<0.000000e+00> : vector<4x32xf32>
    %77 = tpu.matmul %74, %16, %cst_30 {dimension_numbers = #tpu.dot_dimension_numbers<[1], [0], [0], [1], [0, 0, 1, 1], [], []>} : vector<4x32xf32>, vector<32x32xf32>, vector<4x32xf32> -> vector<4x32xf32>
    %78 = vector.broadcast %17 : vector<1x32xf32> to vector<4x32xf32>
    %79 = arith.addf %77, %78 : vector<4x32xf32>
    %80 = vector.shape_cast %8 : vector<1x4x32xf32> to vector<4x32xf32>
    %81 = arith.addf %80, %75 : vector<4x32xf32>
    %82 = arith.negf %81 : vector<4x32xf32>
    %83 = math.exp %82 : vector<4x32xf32>
    %cst_31 = arith.constant 1.000000e+00 : f32
    %84 = vector.broadcast %cst_31 : f32 to vector<4x32xf32>
    %85 = arith.addf %84, %83 : vector<4x32xf32>
    %86 = arith.divf %84, %85 : vector<4x32xf32>
    %87 = vector.shape_cast %9 : vector<1x4x32xf32> to vector<4x32xf32>
    %88 = arith.addf %87, %76 : vector<4x32xf32>
    %89 = arith.negf %88 : vector<4x32xf32>
    %90 = math.exp %89 : vector<4x32xf32>
    %cst_32 = arith.constant 1.000000e+00 : f32
    %91 = vector.broadcast %cst_32 : f32 to vector<4x32xf32>
    %92 = arith.addf %91, %90 : vector<4x32xf32>
    %93 = arith.divf %91, %92 : vector<4x32xf32>
    %94 = vector.shape_cast %10 : vector<1x4x32xf32> to vector<4x32xf32>
    %95 = arith.mulf %86, %79 : vector<4x32xf32>
    %96 = arith.addf %94, %95 : vector<4x32xf32>
    %97 = math.tanh %96 : vector<4x32xf32>
    %cst_33 = arith.constant 1.000000e+00 : f32
    %98 = vector.broadcast %cst_33 : f32 to vector<4x32xf32>
    %99 = arith.subf %98, %93 : vector<4x32xf32>
    %100 = arith.mulf %99, %97 : vector<4x32xf32>
    %101 = arith.mulf %93, %74 : vector<4x32xf32>
    %102 = arith.addf %100, %101 : vector<4x32xf32>
    %cst_34 = arith.constant dense<0.000000e+00> : vector<4x32xf32>
    %103 = tpu.matmul %102, %12, %cst_34 {dimension_numbers = #tpu.dot_dimension_numbers<[1], [0], [0], [1], [0, 0, 1, 1], [], []>} : vector<4x32xf32>, vector<32x32xf32>, vector<4x32xf32> -> vector<4x32xf32>
    %cst_35 = arith.constant dense<0.000000e+00> : vector<4x32xf32>
    %104 = tpu.matmul %102, %14, %cst_35 {dimension_numbers = #tpu.dot_dimension_numbers<[1], [0], [0], [1], [0, 0, 1, 1], [], []>} : vector<4x32xf32>, vector<32x32xf32>, vector<4x32xf32> -> vector<4x32xf32>
    %cst_36 = arith.constant dense<0.000000e+00> : vector<4x32xf32>
    %105 = tpu.matmul %102, %16, %cst_36 {dimension_numbers = #tpu.dot_dimension_numbers<[1], [0], [0], [1], [0, 0, 1, 1], [], []>} : vector<4x32xf32>, vector<32x32xf32>, vector<4x32xf32> -> vector<4x32xf32>
    %106 = vector.broadcast %17 : vector<1x32xf32> to vector<4x32xf32>
    %107 = arith.addf %105, %106 : vector<4x32xf32>
    %108 = vector.shape_cast %8 : vector<1x4x32xf32> to vector<4x32xf32>
    %109 = arith.addf %108, %103 : vector<4x32xf32>
    %110 = arith.negf %109 : vector<4x32xf32>
    %111 = math.exp %110 : vector<4x32xf32>
    %cst_37 = arith.constant 1.000000e+00 : f32
    %112 = vector.broadcast %cst_37 : f32 to vector<4x32xf32>
    %113 = arith.addf %112, %111 : vector<4x32xf32>
    %114 = arith.divf %112, %113 : vector<4x32xf32>
    %115 = vector.shape_cast %9 : vector<1x4x32xf32> to vector<4x32xf32>
    %116 = arith.addf %115, %104 : vector<4x32xf32>
    %117 = arith.negf %116 : vector<4x32xf32>
    %118 = math.exp %117 : vector<4x32xf32>
    %cst_38 = arith.constant 1.000000e+00 : f32
    %119 = vector.broadcast %cst_38 : f32 to vector<4x32xf32>
    %120 = arith.addf %119, %118 : vector<4x32xf32>
    %121 = arith.divf %119, %120 : vector<4x32xf32>
    %122 = vector.shape_cast %10 : vector<1x4x32xf32> to vector<4x32xf32>
    %123 = arith.mulf %114, %107 : vector<4x32xf32>
    %124 = arith.addf %122, %123 : vector<4x32xf32>
    %125 = math.tanh %124 : vector<4x32xf32>
    %cst_39 = arith.constant 1.000000e+00 : f32
    %126 = vector.broadcast %cst_39 : f32 to vector<4x32xf32>
    %127 = arith.subf %126, %121 : vector<4x32xf32>
    %128 = arith.mulf %127, %125 : vector<4x32xf32>
    %129 = arith.mulf %121, %102 : vector<4x32xf32>
    %130 = arith.addf %128, %129 : vector<4x32xf32>
    %131 = tpu.concatenate %46, %74, %102, %130 in 1 : vector<4x32xf32>, vector<4x32xf32>, vector<4x32xf32>, vector<4x32xf32> -> vector<4x128xf32>
    %c0_40 = arith.constant 0 : index
    %c0_41 = arith.constant 0 : index
    %132 = vector.load %arg5[%c0_40, %c0_41] : memref<128x8xf32, #tpu.memory_space<vmem>>, vector<128x8xf32>
    %cst_42 = arith.constant dense<0.000000e+00> : vector<4x8xf32>
    %133 = tpu.matmul %131, %132, %cst_42 {dimension_numbers = #tpu.dot_dimension_numbers<[1], [0], [0], [1], [0, 0, 1, 1], [], []>} : vector<4x128xf32>, vector<128x8xf32>, vector<4x8xf32> -> vector<4x8xf32>
    %c0_43 = arith.constant 0 : index
    %c0_44 = arith.constant 0 : index
    %134 = vector.load %arg6[%c0_43, %c0_44] : memref<1x8xf32, #tpu.memory_space<vmem>>, vector<1x8xf32>
    %135 = vector.broadcast %134 : vector<1x8xf32> to vector<4x8xf32>
    %136 = arith.addf %133, %135 : vector<4x8xf32>
    %c0_45 = arith.constant 0 : index
    %c0_46 = arith.constant 0 : index
    %137 = vector.load %arg7[%c0_45, %c0_46] : memref<4x8xf32, #tpu.memory_space<vmem>>, vector<4x8xf32>
    tpu.vector_store %arg7[%c0_45, %c0_46], %136 {strides = array<i32>} : memref<4x8xf32, #tpu.memory_space<vmem>>, vector<4x8xf32>,
    return
  }
}

</mosaic_0001>

<llo_original>
// kernel: tpu_custom_call.1
$region0: #{tpu_custom_call.1}
  #allocation0 [shape = 'u32[]', space=smem, size = 0x4, offset = 0x4, fixed_abs, tag = 'smem constant byte address 0x4 - core index']
  #allocation1 [shape = 'u32[144,128]{1,0:T(1,128)}', space=vmem, size = 0x12000, scoped, tag = 'internal scratch']
  %s0 = inlined_call_operand.vmem [shape: f32[1,4,32], index: 0, kind: input, shape index: {}]
  %s1 = inlined_call_operand.vmem [shape: f32[32,96], index: 1, kind: input, shape index: {}]
  %s2 = inlined_call_operand.vmem [shape: f32[1,96], index: 2, kind: input, shape index: {}]
  %s3 = inlined_call_operand.vmem [shape: f32[3,32,32], index: 3, kind: input, shape index: {}]
  %s4 = inlined_call_operand.vmem [shape: f32[1,32], index: 4, kind: input, shape index: {}]
  %s5 = inlined_call_operand.vmem [shape: f32[128,8], index: 5, kind: input, shape index: {}]
  %s6 = inlined_call_operand.vmem [shape: f32[1,8], index: 6, kind: input, shape index: {}]
  %s7 = inlined_call_operand.hbm [shape: f32[4,8], index: 7, kind: output, shape index: {}]
  %s8 = sld [smem:[#allocation0]]
  $region38: #{tpu_custom_call.1} parent=0
    _
  %s10 = ssub.s32 1, %s8
  %s11 = scalar_select 0, %s10, %s8
  $region1: #{tpu_custom_call.1} parent=0
    #allocation2 [shape = 'u8[2048]{0}', space=vmem, size = 0x800, scoped, tag = 'output window, operand 0, single buffered']
    #allocation3 [shape = 's32[1]{0}', space=sflag, size = 0x4, scoped, tag = 'scoped memory for tpu_custom_call.1']
    %12 = vsyncpa [#allocation3], 0
    // Predicated region
    $region2: #{tpu_custom_call.1} parent=1 // pred_check
      _
    $region3: #{tpu_custom_call.1} parent=1 // pred_check_branch
      %14 = sbr.rel (0) target = $region5
    $region4: #{tpu_custom_call.1} parent=1 // pred_region
      _
    $region5: #{tpu_custom_call.1} parent=1 // pred_fallthru
      _
    // Predicated region
    $region6: #{tpu_custom_call.1} parent=1 // pred_check
      _
    $region7: #{tpu_custom_call.1} parent=1 // pred_check_branch
      %16 = sbr.rel (0) target = $region9
    $region8: #{tpu_custom_call.1} parent=1 // pred_region
      _
    $region9: #{tpu_custom_call.1} parent=1 // pred_fallthru
      _
    // Predicated region
    $region10: #{tpu_custom_call.1} parent=1 // pred_check
      _
    $region11: #{tpu_custom_call.1} parent=1 // pred_check_branch
      %18 = sbr.rel (0) target = $region13
    $region12: #{tpu_custom_call.1} parent=1 // pred_region
      _
    $region13: #{tpu_custom_call.1} parent=1 // pred_fallthru
      _
    // Predicated region
    $region14: #{tpu_custom_call.1} parent=1 // pred_check
      _
    $region15: #{tpu_custom_call.1} parent=1 // pred_check_branch
      %20 = sbr.rel (0) target = $region17
    $region16: #{tpu_custom_call.1} parent=1 // pred_region
      _
    $region17: #{tpu_custom_call.1} parent=1 // pred_fallthru
      _
    // Predicated region
    $region18: #{tpu_custom_call.1} parent=1 // pred_check
      _
    $region19: #{tpu_custom_call.1} parent=1 // pred_check_branch
      %22 = sbr.rel (0) target = $region21
    $region20: #{tpu_custom_call.1} parent=1 // pred_region
      _
    $region21: #{tpu_custom_call.1} parent=1 // pred_fallthru
      _
    // Predicated region
    $region22: #{tpu_custom_call.1} parent=1 // pred_check
      _
    $region23: #{tpu_custom_call.1} parent=1 // pred_check_branch
      %24 = sbr.rel (0) target = $region25
    $region24: #{tpu_custom_call.1} parent=1 // pred_region
      _
    $region25: #{tpu_custom_call.1} parent=1 // pred_fallthru
      _
    // Predicated region
    $region26: #{tpu_custom_call.1} parent=1 // pred_check
      _
    $region27: #{tpu_custom_call.1} parent=1 // pred_check_branch
      %26 = sbr.rel (0) target = $region29
    $region28: #{tpu_custom_call.1} parent=1 // pred_region
      _
    $region29: #{tpu_custom_call.1} parent=1 // pred_fallthru
      _
    %v27 = vld [vmem:[%s0] sm:$0xf]
    %v28 = vld [vmem:[%s1] sm:$0xff]
    %v29 = vld [vmem:[%s1 + $0x8] sm:$0xff]
    %v30 = vld [vmem:[%s1 + $0x10] sm:$0xff]
    %v31 = vld [vmem:[%s1 + $0x18] sm:$0xff]
    %v32 = vld [vmem:[%s2] sm:$0x1]
    %v34 = vlaneseq
    %v35 = vshrl.u32 %v34, 7
    %v36 = vsub.s32 0, %v35
    %v37 = vrot.slane %v32, %v36
    %vm39 = vcmask 261120
    %v41 = vsel %vm39, %v27, 0
    %43 = vmatprep.subr.mxu0 0.0
    %44 = vmatpush1.msra.mxu0 %v28
    %45 = vmatprep.subr.mxu0 0.0
    %46 = vmatpush1.msra.mxu0 %v29
    %47 = vmatprep.subr.mxu0 0.0
    %48 = vmatpush1.msra.mxu0 %v30
    %49 = vmatprep.subr.mxu0 0.0
    %50 = vmatpush1.msra.mxu0 %v31
    %51 = vmatprep.subr.mxu0 0.0
    %52 = vmatpush1.msra.mxu0 0.0
    %53 = vmatprep.subr.mxu0 0.0
    %54 = vmatpush1.msra.mxu0 0.0
    %55 = vmatprep.subr.mxu0 0.0
    %56 = vmatpush1.msra.mxu0 0.0
    %57 = vmatprep.subr.mxu0 0.0
    %58 = vmatpush1.msra.mxu0 0.0
    %59 = vmatprep.subr.mxu0 0.0
    %60 = vmatpush1.msra.mxu0 0.0
    %61 = vmatprep.subr.mxu0 0.0
    %62 = vmatpush1.msra.mxu0 0.0
    %63 = vmatprep.subr.mxu0 0.0
    %64 = vmatpush1.msra.mxu0 0.0
    %65 = vmatprep.subr.mxu0 0.0
    %66 = vmatpush1.msra.mxu0 0.0
    %67 = vmatprep.subr.mxu0 0.0
    %68 = vmatpush1.msra.mxu0 0.0
    %69 = vmatprep.subr.mxu0 0.0
    %70 = vmatpush1.msra.mxu0 0.0
    %71 = vmatprep.subr.mxu0 0.0
    %72 = vmatpush1.msra.mxu0 0.0
    %73 = vmatprep.subr.mxu0 0.0
    %74 = vmatpush1.msra.mxu0 0.0
    %75 = vmatprep.subr.mxu0 0.0
    %76 = vmatpush1.msra.mxu0 0.0
    %77 = vmatprep.subr.mxu0 0.0
    %78 = vmatpush1.msra.mxu0 0.0
    %79 = vmatprep.subr.mxu0 0.0
    %80 = vmatpush1.msra.mxu0 0.0
    %81 = vmatprep.subr.mxu0 0.0
    %82 = vmatpush1.msra.mxu0 0.0
    %83 = vmatprep.subr.mxu0 0.0
    %84 = vmatpush1.msra.mxu0 0.0
    %85 = vmatprep.subr.mxu0 0.0
    %86 = vmatpush1.msra.mxu0 0.0
    %87 = vmatprep.subr.mxu0 0.0
    %88 = vmatpush1.msra.mxu0 0.0
    %89 = vmatprep.subr.mxu0 0.0
    %90 = vmatpush1.msra.mxu0 0.0
    %91 = vmatprep.subr.mxu0 0.0
    %92 = vmatpush1.msra.mxu0 0.0
    %93 = vmatprep.subr.mxu0 0.0
    %94 = vmatpush1.msra.mxu0 0.0
    %95 = vmatprep.subr.mxu0 0.0
    %96 = vmatpush1.msra.mxu0 0.0
    %97 = vmatprep.subr.mxu0 0.0
    %98 = vmatpush1.msra.mxu0 0.0
    %99 = vmatprep.subr.mxu0 0.0
    %100 = vmatpush1.msra.mxu0 0.0
    %101 = vmatprep.subr.mxu0 0.0
    %102 = vmatpush1.msra.mxu0 0.0
    %103 = vmatprep.subr.mxu0 0.0
    %104 = vmatpush1.msra.mxu0 0.0
    %105 = vmatprep.subr.mxu0 0.0
    %106 = vmatpush1.msra.mxu0 0.0
    %107 = vmatprep.mubr.f32.mxu0 0.0
    %108 = vmatmul.mubr.f32.gmra.mrb[0].mxu0 %v41
    %v109 = vpop.f32.mrb[0].mxu0
    %v110 = vadd.f32 %v37, %v109
    %v111 = vpop.f32.mrb[0].mxu0
    %112 = vdwg.mxu0
    %v113 = vld [vmem:[%s3] sm:$0xff]
    %v114 = vld [vmem:[%s3 + $0x8] sm:$0xff]
    %v115 = vld [vmem:[%s3 + $0x10] sm:$0xff]
    %v116 = vld [vmem:[%s3 + $0x18] sm:$0xff]
    %s117 = scalar_lea.vmem %s3, 32
    %v118 = vld [vmem:[%s117] sm:$0xff]
    %v119 = vld [vmem:[%s117 + $0x8] sm:$0xff]
    %v120 = vld [vmem:[%s117 + $0x10] sm:$0xff]
    %v121 = vld [vmem:[%s117 + $0x18] sm:$0xff]
    %s122 = scalar_lea.vmem %s3, 64
    %v123 = vld [vmem:[%s122] sm:$0xff]
    %v124 = vld [vmem:[%s122 + $0x8] sm:$0xff]
    %v125 = vld [vmem:[%s122 + $0x10] sm:$0xff]
    %v126 = vld [vmem:[%s122 + $0x18] sm:$0xff]
    %v127 = vld [vmem:[%s4] sm:$0x1]
    %v129 = vsel %vm39, 0.0, 0
    %131 = vmatprep.subr.mxu0 0.0
    %132 = vmatpush1.msra.mxu0 %v113
    %133 = vmatprep.subr.mxu0 0.0
    %134 = vmatpush1.msra.mxu0 %v114
    %135 = vmatprep.subr.mxu0 0.0
    %136 = vmatpush1.msra.mxu0 %v115
    %137 = vmatprep.subr.mxu0 0.0
    %138 = vmatpush1.msra.mxu0 %v116
    %139 = vmatprep.subr.mxu0 0.0
    %140 = vmatpush1.msra.mxu0 0.0
    %141 = vmatprep.subr.mxu0 0.0
    %142 = vmatpush1.msra.mxu0 0.0
    %143 = vmatprep.subr.mxu0 0.0
    %144 = vmatpush1.msra.mxu0 0.0
    %145 = vmatprep.subr.mxu0 0.0
    %146 = vmatpush1.msra.mxu0 0.0
    %147 = vmatprep.subr.mxu0 0.0
    %148 = vmatpush1.msra.mxu0 0.0
    %149 = vmatprep.subr.mxu0 0.0
    %150 = vmatpush1.msra.mxu0 0.0
    %151 = vmatprep.subr.mxu0 0.0
    %152 = vmatpush1.msra.mxu0 0.0
    %153 = vmatprep.subr.mxu0 0.0
    %154 = vmatpush1.msra.mxu0 0.0
    %155 = vmatprep.subr.mxu0 0.0
    %156 = vmatpush1.msra.mxu0 0.0
    %157 = vmatprep.subr.mxu0 0.0
    %158 = vmatpush1.msra.mxu0 0.0
    %159 = vmatprep.subr.mxu0 0.0
    %160 = vmatpush1.msra.mxu0 0.0
    %161 = vmatprep.subr.mxu0 0.0
    %162 = vmatpush1.msra.mxu0 0.0
    %163 = vmatprep.subr.mxu0 0.0
    %164 = vmatpush1.msra.mxu0 0.0
    %165 = vmatprep.subr.mxu0 0.0
    %166 = vmatpush1.msra.mxu0 0.0
    %167 = vmatprep.subr.mxu0 0.0
    %168 = vmatpush1.msra.mxu0 0.0
    %169 = vmatprep.subr.mxu0 0.0
    %170 = vmatpush1.msra.mxu0 0.0
    %171 = vmatprep.subr.mxu0 0.0
    %172 = vmatpush1.msra.mxu0 0.0
    %173 = vmatprep.subr.mxu0 0.0
    %174 = vmatpush1.msra.mxu0 0.0
    %175 = vmatprep.subr.mxu0 0.0
    %176 = vmatpush1.msra.mxu0 0.0
    %177 = vmatprep.subr.mxu0 0.0
    %178 = vmatpush1.msra.mxu0 0.0
    %179 = vmatprep.subr.mxu0 0.0
    %180 = vmatpush1.msra.mxu0 0.0
    %181 = vmatprep.subr.mxu0 0.0
    %182 = vmatpush1.msra.mxu0 0.0
    %183 = vmatprep.subr.mxu0 0.0
    %184 = vmatpush1.msra.mxu0 0.0
    %185 = vmatprep.subr.mxu0 0.0
    %186 = vmatpush1.msra.mxu0 0.0
    %187 = vmatprep.subr.mxu0 0.0
    %188 = vmatpush1.msra.mxu0 0.0
    %189 = vmatprep.subr.mxu0 0.0
    %190 = vmatpush1.msra.mxu0 0.0
    %191 = vmatprep.subr.mxu0 0.0
    %192 = vmatpush1.msra.mxu0 0.0
    %193 = vmatprep.subr.mxu0 0.0
    %194 = vmatpush1.msra.mxu0 0.0
    %195 = vmatprep.mubr.f32.mxu0 0.0
    %196 = vmatmul.mubr.f32.gmra.mrb[0].mxu0 %v129
    %v197 = vpop.f32.mrb[0].mxu0
    %v198 = vadd.f32 0.0, %v197
    %v199 = vpop.f32.mrb[0].mxu0
    %200 = vdwg.mxu0
    %201 = vmatprep.subr.mxu0 0.0
    %202 = vmatpush1.msra.mxu0 %v118
    %203 = vmatprep.subr.mxu0 0.0
    %204 = vmatpush1.msra.mxu0 %v119
    %205 = vmatprep.subr.mxu0 0.0
    %206 = vmatpush1.msra.mxu0 %v120
    %207 = vmatprep.subr.mxu0 0.0
    %208 = vmatpush1.msra.mxu0 %v121
    %209 = vmatprep.subr.mxu0 0.0
    %210 = vmatpush1.msra.mxu0 0.0
    %211 = vmatprep.subr.mxu0 0.0
    %212 = vmatpush1.msra.mxu0 0.0
    %213 = vmatprep.subr.mxu0 0.0
    %214 = vmatpush1.msra.mxu0 0.0
    %215 = vmatprep.subr.mxu0 0.0
    %216 = vmatpush1.msra.mxu0 0.0
    %217 = vmatprep.subr.mxu0 0.0
    %218 = vmatpush1.msra.mxu0 0.0
    %219 = vmatprep.subr.mxu0 0.0
    %220 = vmatpush1.msra.mxu0 0.0
    %221 = vmatprep.subr.mxu0 0.0
    %222 = vmatpush1.msra.mxu0 0.0
    %223 = vmatprep.subr.mxu0 0.0
    %224 = vmatpush1.msra.mxu0 0.0
    %225 = vmatprep.subr.mxu0 0.0
    %226 = vmatpush1.msra.mxu0 0.0
    %227 = vmatprep.subr.mxu0 0.0
    %228 = vmatpush1.msra.mxu0 0.0
    %229 = vmatprep.subr.mxu0 0.0
    %230 = vmatpush1.msra.mxu0 0.0
    %231 = vmatprep.subr.mxu0 0.0
    %232 = vmatpush1.msra.mxu0 0.0
    %233 = vmatprep.subr.mxu0 0.0
    %234 = vmatpush1.msra.mxu0 0.0
    %235 = vmatprep.subr.mxu0 0.0
    %236 = vmatpush1.msra.mxu0 0.0
    %237 = vmatprep.subr.mxu0 0.0
    %238 = vmatpush1.msra.mxu0 0.0
    %239 = vmatprep.subr.mxu0 0.0
    %240 = vmatpush1.msra.mxu0 0.0
    %241 = vmatprep.subr.mxu0 0.0
    %242 = vmatpush1.msra.mxu0 0.0
    %243 = vmatprep.subr.mxu0 0.0
    %244 = vmatpush1.msra.mxu0 0.0
    %245 = vmatprep.subr.mxu0 0.0
    %246 = vmatpush1.msra.mxu0 0.0
    %247 = vmatprep.subr.mxu0 0.0
    %248 = vmatpush1.msra.mxu0 0.0
    %249 = vmatprep.subr.mxu0 0.0
    %250 = vmatpush1.msra.mxu0 0.0
    %251 = vmatprep.subr.mxu0 0.0
    %252 = vmatpush1.msra.mxu0 0.0
    %253 = vmatprep.subr.mxu0 0.0
    %254 = vmatpush1.msra.mxu0 0.0
    %255 = vmatprep.subr.mxu0 0.0
    %256 = vmatpush1.msra.mxu0 0.0
    %257 = vmatprep.subr.mxu0 0.0
    %258 = vmatpush1.msra.mxu0 0.0
    %259 = vmatprep.subr.mxu0 0.0
    %260 = vmatpush1.msra.mxu0 0.0
    %261 = vmatprep.subr.mxu0 0.0
    %262 = vmatpush1.msra.mxu0 0.0
    %263 = vmatprep.subr.mxu0 0.0
    %264 = vmatpush1.msra.mxu0 0.0
    %265 = vmatprep.mubr.f32.mxu0 0.0
    %266 = vmatmul.mubr.f32.gmra.mrb[0].mxu0 %v129
    %v267 = vpop.f32.mrb[0].mxu0
    %v268 = vadd.f32 0.0, %v267
    %v269 = vpop.f32.mrb[0].mxu0
    %270 = vdwg.mxu0
    %v272 = vlaneseq
    %v273 = vshrl.u32 %v272, 7
    %v274 = vsub.s32 0, %v273
    %v275 = vrot.slane %v127, %v274
    %277 = vmatprep.subr.mxu0 0.0
    %278 = vmatpush1.msra.mxu0 %v123
    %279 = vmatprep.subr.mxu0 0.0
    %280 = vmatpush1.msra.mxu0 %v124
    %281 = vmatprep.subr.mxu0 0.0
    %282 = vmatpush1.msra.mxu0 %v125
    %283 = vmatprep.subr.mxu0 0.0
    %284 = vmatpush1.msra.mxu0 %v126
    %285 = vmatprep.subr.mxu0 0.0
    %286 = vmatpush1.msra.mxu0 0.0
    %287 = vmatprep.subr.mxu0 0.0
    %288 = vmatpush1.msra.mxu0 0.0
    %289 = vmatprep.subr.mxu0 0.0
    %290 = vmatpush1.msra.mxu0 0.0
    %291 = vmatprep.subr.mxu0 0.0
    %292 = vmatpush1.msra.mxu0 0.0
    %293 = vmatprep.subr.mxu0 0.0
    %294 = vmatpush1.msra.mxu0 0.0
    %295 = vmatprep.subr.mxu0 0.0
    %296 = vmatpush1.msra.mxu0 0.0
    %297 = vmatprep.subr.mxu0 0.0
    %298 = vmatpush1.msra.mxu0 0.0
    %299 = vmatprep.subr.mxu0 0.0
    %300 = vmatpush1.msra.mxu0 0.0
    %301 = vmatprep.subr.mxu0 0.0
    %302 = vmatpush1.msra.mxu0 0.0
    %303 = vmatprep.subr.mxu0 0.0
    %304 = vmatpush1.msra.mxu0 0.0
    %305 = vmatprep.subr.mxu0 0.0
    %306 = vmatpush1.msra.mxu0 0.0
    %307 = vmatprep.subr.mxu0 0.0
    %308 = vmatpush1.msra.mxu0 0.0
    %309 = vmatprep.subr.mxu0 0.0
    %310 = vmatpush1.msra.mxu0 0.0
    %311 = vmatprep.subr.mxu0 0.0
    %312 = vmatpush1.msra.mxu0 0.0
    %313 = vmatprep.subr.mxu0 0.0
    %314 = vmatpush1.msra.mxu0 0.0
    %315 = vmatprep.subr.mxu0 0.0
    %316 = vmatpush1.msra.mxu0 0.0
    %317 = vmatprep.subr.mxu0 0.0
    %318 = vmatpush1.msra.mxu0 0.0
    %319 = vmatprep.subr.mxu0 0.0
    %320 = vmatpush1.msra.mxu0 0.0
    %321 = vmatprep.subr.mxu0 0.0
    %322 = vmatpush1.msra.mxu0 0.0
    %323 = vmatprep.subr.mxu0 0.0
    %324 = vmatpush1.msra.mxu0 0.0
    %325 = vmatprep.subr.mxu0 0.0
    %326 = vmatpush1.msra.mxu0 0.0
    %327 = vmatprep.subr.mxu0 0.0
    %328 = vmatpush1.msra.mxu0 0.0
    %329 = vmatprep.subr.mxu0 0.0
    %330 = vmatpush1.msra.mxu0 0.0
    %331 = vmatprep.subr.mxu0 0.0
    %332 = vmatpush1.msra.mxu0 0.0
    %333 = vmatprep.subr.mxu0 0.0
    %334 = vmatpush1.msra.mxu0 0.0
    %335 = vmatprep.subr.mxu0 0.0
    %336 = vmatpush1.msra.mxu0 0.0
    %337 = vmatprep.subr.mxu0 0.0
    %338 = vmatpush1.msra.mxu0 0.0
    %339 = vmatprep.subr.mxu0 0.0
    %340 = vmatpush1.msra.mxu0 0.0
    %341 = vmatprep.mubr.f32.mxu0 0.0
    %342 = vmatmul.mubr.f32.gmra.mrb[0].mxu0 %v129
    %v343 = vpop.f32.mrb[0].mxu0
    %v344 = vadd.f32 %v275, %v343
    %v345 = vpop.f32.mrb[0].mxu0
    %346 = vdwg.mxu0
    %v347 = vadd.f32 %v110, %v198
    %v348 = vxor.u32 %v347, 2147483648
    %v349 = vmul.f32 %v348, 1.442695
    %v350 = vpow.pop %v349
    %v351 = vadd.f32 %v350, 1.0
    %v352 = vrcp.pop %v351
    %v353 = vmul.f32 1.0, %v352
    %355 = vrot.lane.b32.xlu0 %v268, 32
    %v356 = vpop.permute.xlu0 %355
    %v358 = vadd.f32 %v110, %v356
    %v359 = vxor.u32 %v358, 2147483648
    %v360 = vmul.f32 %v359, 1.442695
    %v361 = vpow.pop %v360
    %v362 = vadd.f32 %v361, 1.0
    %v363 = vrcp.pop %v362
    %v364 = vmul.f32 1.0, %v363
    %v365 = vmul.f32 %v353, %v344
    %367 = vrot.lane.b32.xlu0 %v365, 64
    %v368 = vpop.permute.xlu0 %367
    %v370 = vadd.f32 %v110, %v368
    %v371 = vtanh.pop %v370
    %v372 = vsub.f32 1.0, %v364
    %374 = vrot.lane.b32.xlu0 %v371, 96
    %v375 = vpop.permute.xlu0 %374
    %v377 = vmul.f32 %v372, %v375
    %v378 = vmul.f32 %v364, 0.0
    %v379 = vadd.f32 %v377, %v378
    %381 = vrot.lane.b32.xlu0 %v379, 96
    %v382 = vpop.permute.xlu0 %381
    %v383 = vsel %vm39, %v382, 0
    %385 = vmatprep.subr.mxu0 0.0
    %386 = vmatpush1.msra.mxu0 %v113
    %387 = vmatprep.subr.mxu0 0.0
    %388 = vmatpush1.msra.mxu0 %v114
    %389 = vmatprep.subr.mxu0 0.0
    %390 = vmatpush1.msra.mxu0 %v115
    %391 = vmatprep.subr.mxu0 0.0
    %392 = vmatpush1.msra.mxu0 %v116
    %393 = vmatprep.subr.mxu0 0.0
    %394 = vmatpush1.msra.mxu0 0.0
    %395 = vmatprep.subr.mxu0 0.0
    %396 = vmatpush1.msra.mxu0 0.0
    %397 = vmatprep.subr.mxu0 0.0
    %398 = vmatpush1.msra.mxu0 0.0
    %399 = vmatprep.subr.mxu0 0.0
    %400 = vmatpush1.msra.mxu0 0.0
    %401 = vmatprep.subr.mxu0 0.0
    %402 = vmatpush1.msra.mxu0 0.0
    %403 = vmatprep.subr.mxu0 0.0
    %404 = vmatpush1.msra.mxu0 0.0
    %405 = vmatprep.subr.mxu0 0.0
    %406 = vmatpush1.msra.mxu0 0.0
    %407 = vmatprep.subr.mxu0 0.0
    %408 = vmatpush1.msra.mxu0 0.0
    %409 = vmatprep.subr.mxu0 0.0
    %410 = vmatpush1.msra.mxu0 0.0
    %411 = vmatprep.subr.mxu0 0.0
    %412 = vmatpush1.msra.mxu0 0.0
    %413 = vmatprep.subr.mxu0 0.0
    %414 = vmatpush1.msra.mxu0 0.0
    %415 = vmatprep.subr.mxu0 0.0
    %416 = vmatpush1.msra.mxu0 0.0
    %417 = vmatprep.subr.mxu0 0.0
    %418 = vmatpush1.msra.mxu0 0.0
    %419 = vmatprep.subr.mxu0 0.0
    %420 = vmatpush1.msra.mxu0 0.0
    %421 = vmatprep.subr.mxu0 0.0
    %422 = vmatpush1.msra.mxu0 0.0
    %423 = vmatprep.subr.mxu0 0.0
    %424 = vmatpush1.msra.mxu0 0.0
    %425 = vmatprep.subr.mxu0 0.0
    %426 = vmatpush1.msra.mxu0 0.0
    %427 = vmatprep.subr.mxu0 0.0
    %428 = vmatpush1.msra.mxu0 0.0
    %429 = vmatprep.subr.mxu0 0.0
    %430 = vmatpush1.msra.mxu0 0.0
    %431 = vmatprep.subr.mxu0 0.0
    %432 = vmatpush1.msra.mxu0 0.0
    %433 = vmatprep.subr.mxu0 0.0
    %434 = vmatpush1.msra.mxu0 0.0
    %435 = vmatprep.subr.mxu0 0.0
    %436 = vmatpush1.msra.mxu0 0.0
    %437 = vmatprep.subr.mxu0 0.0
    %438 = vmatpush1.msra.mxu0 0.0
    %439 = vmatprep.subr.mxu0 0.0
    %440 = vmatpush1.msra.mxu0 0.0
    %441 = vmatprep.subr.mxu0 0.0
    %442 = vmatpush1.msra.mxu0 0.0
    %443 = vmatprep.subr.mxu0 0.0
    %444 = vmatpush1.msra.mxu0 0.0
    %445 = vmatprep.subr.mxu0 0.0
    %446 = vmatpush1.msra.mxu0 0.0
    %447 = vmatprep.subr.mxu0 0.0
    %448 = vmatpush1.msra.mxu0 0.0
    %449 = vmatprep.mubr.f32.mxu0 0.0
    %450 = vmatmul.mubr.f32.gmra.mrb[0].mxu0 %v383
    %v451 = vpop.f32.mrb[0].mxu0
    %v452 = vadd.f32 0.0, %v451
    %v453 = vpop.f32.mrb[0].mxu0
    %454 = vdwg.mxu0
    %455 = vmatprep.subr.mxu0 0.0
    %456 = vmatpush1.msra.mxu0 %v118
    %457 = vmatprep.subr.mxu0 0.0
    %458 = vmatpush1.msra.mxu0 %v119
    %459 = vmatprep.subr.mxu0 0.0
    %460 = vmatpush1.msra.mxu0 %v120
    %461 = vmatprep.subr.mxu0 0.0
    %462 = vmatpush1.msra.mxu0 %v121
    %463 = vmatprep.subr.mxu0 0.0
    %464 = vmatpush1.msra.mxu0 0.0
    %465 = vmatprep.subr.mxu0 0.0
    %466 = vmatpush1.msra.mxu0 0.0
    %467 = vmatprep.subr.mxu0 0.0
    %468 = vmatpush1.msra.mxu0 0.0
    %469 = vmatprep.subr.mxu0 0.0
    %470 = vmatpush1.msra.mxu0 0.0
    %471 = vmatprep.subr.mxu0 0.0
    %472 = vmatpush1.msra.mxu0 0.0
    %473 = vmatprep.subr.mxu0 0.0
    %474 = vmatpush1.msra.mxu0 0.0
    %475 = vmatprep.subr.mxu0 0.0
    %476 = vmatpush1.msra.mxu0 0.0
    %477 = vmatprep.subr.mxu0 0.0
    %478 = vmatpush1.msra.mxu0 0.0
    %479 = vmatprep.subr.mxu0 0.0
    %480 = vmatpush1.msra.mxu0 0.0
    %481 = vmatprep.subr.mxu0 0.0
    %482 = vmatpush1.msra.mxu0 0.0
    %483 = vmatprep.subr.mxu0 0.0
    %484 = vmatpush1.msra.mxu0 0.0
    %485 = vmatprep.subr.mxu0 0.0
    %486 = vmatpush1.msra.mxu0 0.0
    %487 = vmatprep.subr.mxu0 0.0
    %488 = vmatpush1.msra.mxu0 0.0
    %489 = vmatprep.subr.mxu0 0.0
    %490 = vmatpush1.msra.mxu0 0.0
    %491 = vmatprep.subr.mxu0 0.0
    %492 = vmatpush1.msra.mxu0 0.0
    %493 = vmatprep.subr.mxu0 0.0
    %494 = vmatpush1.msra.mxu0 0.0
    %495 = vmatprep.subr.mxu0 0.0
    %496 = vmatpush1.msra.mxu0 0.0
    %497 = vmatprep.subr.mxu0 0.0
    %498 = vmatpush1.msra.mxu0 0.0
    %499 = vmatprep.subr.mxu0 0.0
    %500 = vmatpush1.msra.mxu0 0.0
    %501 = vmatprep.subr.mxu0 0.0
    %502 = vmatpush1.msra.mxu0 0.0
    %503 = vmatprep.subr.mxu0 0.0
    %504 = vmatpush1.msra.mxu0 0.0
    %505 = vmatprep.subr.mxu0 0.0
    %506 = vmatpush1.msra.mxu0 0.0
    %507 = vmatprep.subr.mxu0 0.0
    %508 = vmatpush1.msra.mxu0 0.0
    %509 = vmatprep.subr.mxu0 0.0
    %510 = vmatpush1.msra.mxu0 0.0
    %511 = vmatprep.subr.mxu0 0.0
    %512 = vmatpush1.msra.mxu0 0.0
    %513 = vmatprep.subr.mxu0 0.0
    %514 = vmatpush1.msra.mxu0 0.0
    %515 = vmatprep.subr.mxu0 0.0
    %516 = vmatpush1.msra.mxu0 0.0
    %517 = vmatprep.subr.mxu0 0.0
    %518 = vmatpush1.msra.mxu0 0.0
    %519 = vmatprep.mubr.f32.mxu0 0.0
    %520 = vmatmul.mubr.f32.gmra.mrb[0].mxu0 %v383
    %v521 = vpop.f32.mrb[0].mxu0
    %v522 = vadd.f32 0.0, %v521
    %v523 = vpop.f32.mrb[0].mxu0
    %524 = vdwg.mxu0
    %525 = vmatprep.subr.mxu0 0.0
    %526 = vmatpush1.msra.mxu0 %v123
    %527 = vmatprep.subr.mxu0 0.0
    %528 = vmatpush1.msra.mxu0 %v124
    %529 = vmatprep.subr.mxu0 0.0
    %530 = vmatpush1.msra.mxu0 %v125
    %531 = vmatprep.subr.mxu0 0.0
    %532 = vmatpush1.msra.mxu0 %v126
    %533 = vmatprep.subr.mxu0 0.0
    %534 = vmatpush1.msra.mxu0 0.0
    %535 = vmatprep.subr.mxu0 0.0
    %536 = vmatpush1.msra.mxu0 0.0
    %537 = vmatprep.subr.mxu0 0.0
    %538 = vmatpush1.msra.mxu0 0.0
    %539 = vmatprep.subr.mxu0 0.0
    %540 = vmatpush1.msra.mxu0 0.0
    %541 = vmatprep.subr.mxu0 0.0
    %542 = vmatpush1.msra.mxu0 0.0
    %543 = vmatprep.subr.mxu0 0.0
    %544 = vmatpush1.msra.mxu0 0.0
    %545 = vmatprep.subr.mxu0 0.0
    %546 = vmatpush1.msra.mxu0 0.0
    %547 = vmatprep.subr.mxu0 0.0
    %548 = vmatpush1.msra.mxu0 0.0
    %549 = vmatprep.subr.mxu0 0.0
    %550 = vmatpush1.msra.mxu0 0.0
    %551 = vmatprep.subr.mxu0 0.0
    %552 = vmatpush1.msra.mxu0 0.0
    %553 = vmatprep.subr.mxu0 0.0
    %554 = vmatpush1.msra.mxu0 0.0
    %555 = vmatprep.subr.mxu0 0.0
    %556 = vmatpush1.msra.mxu0 0.0
    %557 = vmatprep.subr.mxu0 0.0
    %558 = vmatpush1.msra.mxu0 0.0
    %559 = vmatprep.subr.mxu0 0.0
    %560 = vmatpush1.msra.mxu0 0.0
    %561 = vmatprep.subr.mxu0 0.0
    %562 = vmatpush1.msra.mxu0 0.0
    %563 = vmatprep.subr.mxu0 0.0
    %564 = vmatpush1.msra.mxu0 0.0
    %565 = vmatprep.subr.mxu0 0.0
    %566 = vmatpush1.msra.mxu0 0.0
    %567 = vmatprep.subr.mxu0 0.0
    %568 = vmatpush1.msra.mxu0 0.0
    %569 = vmatprep.subr.mxu0 0.0
    %570 = vmatpush1.msra.mxu0 0.0
    %571 = vmatprep.subr.mxu0 0.0
    %572 = vmatpush1.msra.mxu0 0.0
    %573 = vmatprep.subr.mxu0 0.0
    %574 = vmatpush1.msra.mxu0 0.0
    %575 = vmatprep.subr.mxu0 0.0
    %576 = vmatpush1.msra.mxu0 0.0
    %577 = vmatprep.subr.mxu0 0.0
    %578 = vmatpush1.msra.mxu0 0.0
    %579 = vmatprep.subr.mxu0 0.0
    %580 = vmatpush1.msra.mxu0 0.0
    %581 = vmatprep.subr.mxu0 0.0
    %582 = vmatpush1.msra.mxu0 0.0
    %583 = vmatprep.subr.mxu0 0.0
    %584 = vmatpush1.msra.mxu0 0.0
    %585 = vmatprep.subr.mxu0 0.0
    %586 = vmatpush1.msra.mxu0 0.0
    %587 = vmatprep.subr.mxu0 0.0
    %588 = vmatpush1.msra.mxu0 0.0
    %589 = vmatprep.mubr.f32.mxu0 0.0
    %590 = vmatmul.mubr.f32.gmra.mrb[0].mxu0 %v383
    %v591 = vpop.f32.mrb[0].mxu0
    %v592 = vadd.f32 %v275, %v591
    %v593 = vpop.f32.mrb[0].mxu0
    %594 = vdwg.mxu0
    %v595 = vadd.f32 %v110, %v452
    %v596 = vxor.u32 %v595, 2147483648
    %v597 = vmul.f32 %v596, 1.442695
    %v598 = vpow.pop %v597
    %v599 = vadd.f32 %v598, 1.0
    %v600 = vrcp.pop %v599
    %v601 = vmul.f32 1.0, %v600
    %603 = vrot.lane.b32.xlu0 %v522, 32
    %v604 = vpop.permute.xlu0 %603
    %v606 = vadd.f32 %v110, %v604
    %v607 = vxor.u32 %v606, 2147483648
    %v608 = vmul.f32 %v607, 1.442695
    %v609 = vpow.pop %v608
    %v610 = vadd.f32 %v609, 1.0
    %v611 = vrcp.pop %v610
    %v612 = vmul.f32 1.0, %v611
    %v613 = vmul.f32 %v601, %v592
    %615 = vrot.lane.b32.xlu0 %v613, 64
    %v616 = vpop.permute.xlu0 %615
    %v618 = vadd.f32 %v110, %v616
    %v619 = vtanh.pop %v618
    %v620 = vsub.f32 1.0, %v612
    %622 = vrot.lane.b32.xlu0 %v619, 96
    %v623 = vpop.permute.xlu0 %622
    %v625 = vmul.f32 %v620, %v623
    %v626 = vmul.f32 %v612, %v379
    %v627 = vadd.f32 %v625, %v626
    %629 = vrot.lane.b32.xlu0 %v627, 96
    %v630 = vpop.permute.xlu0 %629
    %v631 = vsel %vm39, %v630, 0
    %633 = vmatprep.subr.mxu0 0.0
    %634 = vmatpush1.msra.mxu0 %v113
    %635 = vmatprep.subr.mxu0 0.0
    %636 = vmatpush1.msra.mxu0 %v114
    %637 = vmatprep.subr.mxu0 0.0
    %638 = vmatpush1.msra.mxu0 %v115
    %639 = vmatprep.subr.mxu0 0.0
    %640 = vmatpush1.msra.mxu0 %v116
    %641 = vmatprep.subr.mxu0 0.0
    %642 = vmatpush1.msra.mxu0 0.0
    %643 = vmatprep.subr.mxu0 0.0
    %644 = vmatpush1.msra.mxu0 0.0
    %645 = vmatprep.subr.mxu0 0.0
    %646 = vmatpush1.msra.mxu0 0.0
    %647 = vmatprep.subr.mxu0 0.0
    %648 = vmatpush1.msra.mxu0 0.0
    %649 = vmatprep.subr.mxu0 0.0
    %650 = vmatpush1.msra.mxu0 0.0
    %651 = vmatprep.subr.mxu0 0.0
    %652 = vmatpush1.msra.mxu0 0.0
    %653 = vmatprep.subr.mxu0 0.0
    %654 = vmatpush1.msra.mxu0 0.0
    %655 = vmatprep.subr.mxu0 0.0
    %656 = vmatpush1.msra.mxu0 0.0
    %657 = vmatprep.subr.mxu0 0.0
    %658 = vmatpush1.msra.mxu0 0.0
    %659 = vmatprep.subr.mxu0 0.0
    %660 = vmatpush1.msra.mxu0 0.0
    %661 = vmatprep.subr.mxu0 0.0
    %662 = vmatpush1.msra.mxu0 0.0
    %663 = vmatprep.subr.mxu0 0.0
    %664 = vmatpush1.msra.mxu0 0.0
    %665 = vmatprep.subr.mxu0 0.0
    %666 = vmatpush1.msra.mxu0 0.0
    %667 = vmatprep.subr.mxu0 0.0
    %668 = vmatpush1.msra.mxu0 0.0
    %669 = vmatprep.subr.mxu0 0.0
    %670 = vmatpush1.msra.mxu0 0.0
    %671 = vmatprep.subr.mxu0 0.0
    %672 = vmatpush1.msra.mxu0 0.0
    %673 = vmatprep.subr.mxu0 0.0
    %674 = vmatpush1.msra.mxu0 0.0
    %675 = vmatprep.subr.mxu0 0.0
    %676 = vmatpush1.msra.mxu0 0.0
    %677 = vmatprep.subr.mxu0 0.0
    %678 = vmatpush1.msra.mxu0 0.0
    %679 = vmatprep.subr.mxu0 0.0
    %680 = vmatpush1.msra.mxu0 0.0
    %681 = vmatprep.subr.mxu0 0.0
    %682 = vmatpush1.msra.mxu0 0.0
    %683 = vmatprep.subr.mxu0 0.0
    %684 = vmatpush1.msra.mxu0 0.0
    %685 = vmatprep.subr.mxu0 0.0
    %686 = vmatpush1.msra.mxu0 0.0
    %687 = vmatprep.subr.mxu0 0.0
    %688 = vmatpush1.msra.mxu0 0.0
    %689 = vmatprep.subr.mxu0 0.0
    %690 = vmatpush1.msra.mxu0 0.0
    %691 = vmatprep.subr.mxu0 0.0
    %692 = vmatpush1.msra.mxu0 0.0
    %693 = vmatprep.subr.mxu0 0.0
    %694 = vmatpush1.msra.mxu0 0.0
    %695 = vmatprep.subr.mxu0 0.0
    %696 = vmatpush1.msra.mxu0 0.0
    %697 = vmatprep.mubr.f32.mxu0 0.0
    %698 = vmatmul.mubr.f32.gmra.mrb[0].mxu0 %v631
    %v699 = vpop.f32.mrb[0].mxu0
    %v700 = vadd.f32 0.0, %v699
    %v701 = vpop.f32.mrb[0].mxu0
    %702 = vdwg.mxu0
    %703 = vmatprep.subr.mxu0 0.0
    %704 = vmatpush1.msra.mxu0 %v118
    %705 = vmatprep.subr.mxu0 0.0
    %706 = vmatpush1.msra.mxu0 %v119
    %707 = vmatprep.subr.mxu0 0.0
    %708 = vmatpush1.msra.mxu0 %v120
    %709 = vmatprep.subr.mxu0 0.0
    %710 = vmatpush1.msra.mxu0 %v121
    %711 = vmatprep.subr.mxu0 0.0
    %712 = vmatpush1.msra.mxu0 0.0
    %713 = vmatprep.subr.mxu0 0.0
    %714 = vmatpush1.msra.mxu0 0.0
    %715 = vmatprep.subr.mxu0 0.0
    %716 = vmatpush1.msra.mxu0 0.0
    %717 = vmatprep.subr.mxu0 0.0
    %718 = vmatpush1.msra.mxu0 0.0
    %719 = vmatprep.subr.mxu0 0.0
    %720 = vmatpush1.msra.mxu0 0.0
    %721 = vmatprep.subr.mxu0 0.0
    %722 = vmatpush1.msra.mxu0 0.0
    %723 = vmatprep.subr.mxu0 0.0
    %724 = vmatpush1.msra.mxu0 0.0
    %725 = vmatprep.subr.mxu0 0.0
    %726 = vmatpush1.msra.mxu0 0.0
    %727 = vmatprep.subr.mxu0 0.0
    %728 = vmatpush1.msra.mxu0 0.0
    %729 = vmatprep.subr.mxu0 0.0
    %730 = vmatpush1.msra.mxu0 0.0
    %731 = vmatprep.subr.mxu0 0.0
    %732 = vmatpush1.msra.mxu0 0.0
    %733 = vmatprep.subr.mxu0 0.0
    %734 = vmatpush1.msra.mxu0 0.0
    %735 = vmatprep.subr.mxu0 0.0
    %736 = vmatpush1.msra.mxu0 0.0
    %737 = vmatprep.subr.mxu0 0.0
    %738 = vmatpush1.msra.mxu0 0.0
    %739 = vmatprep.subr.mxu0 0.0
    %740 = vmatpush1.msra.mxu0 0.0
    %741 = vmatprep.subr.mxu0 0.0
    %742 = vmatpush1.msra.mxu0 0.0
    %743 = vmatprep.subr.mxu0 0.0
    %744 = vmatpush1.msra.mxu0 0.0
    %745 = vmatprep.subr.mxu0 0.0
    %746 = vmatpush1.msra.mxu0 0.0
    %747 = vmatprep.subr.mxu0 0.0
    %748 = vmatpush1.msra.mxu0 0.0
    %749 = vmatprep.subr.mxu0 0.0
    %750 = vmatpush1.msra.mxu0 0.0
    %751 = vmatprep.subr.mxu0 0.0
    %752 = vmatpush1.msra.mxu0 0.0
    %753 = vmatprep.subr.mxu0 0.0
    %754 = vmatpush1.msra.mxu0 0.0
    %755 = vmatprep.subr.mxu0 0.0
    %756 = vmatpush1.msra.mxu0 0.0
    %757 = vmatprep.subr.mxu0 0.0
    %758 = vmatpush1.msra.mxu0 0.0
    %759 = vmatprep.subr.mxu0 0.0
    %760 = vmatpush1.msra.mxu0 0.0
    %761 = vmatprep.subr.mxu0 0.0
    %762 = vmatpush1.msra.mxu0 0.0
    %763 = vmatprep.subr.mxu0 0.0
    %764 = vmatpush1.msra.mxu0 0.0
    %765 = vmatprep.subr.mxu0 0.0
    %766 = vmatpush1.msra.mxu0 0.0
    %767 = vmatprep.mubr.f32.mxu0 0.0
    %768 = vmatmul.mubr.f32.gmra.mrb[0].mxu0 %v631
    %v769 = vpop.f32.mrb[0].mxu0
    %v770 = vadd.f32 0.0, %v769
    %v771 = vpop.f32.mrb[0].mxu0
    %772 = vdwg.mxu0
    %773 = vmatprep.subr.mxu0 0.0
    %774 = vmatpush1.msra.mxu0 %v123
    %775 = vmatprep.subr.mxu0 0.0
    %776 = vmatpush1.msra.mxu0 %v124
    %777 = vmatprep.subr.mxu0 0.0
    %778 = vmatpush1.msra.mxu0 %v125
    %779 = vmatprep.subr.mxu0 0.0
    %780 = vmatpush1.msra.mxu0 %v126
    %781 = vmatprep.subr.mxu0 0.0
    %782 = vmatpush1.msra.mxu0 0.0
    %783 = vmatprep.subr.mxu0 0.0
    %784 = vmatpush1.msra.mxu0 0.0
    %785 = vmatprep.subr.mxu0 0.0
    %786 = vmatpush1.msra.mxu0 0.0
    %787 = vmatprep.subr.mxu0 0.0
    %788 = vmatpush1.msra.mxu0 0.0
    %789 = vmatprep.subr.mxu0 0.0
    %790 = vmatpush1.msra.mxu0 0.0
    %791 = vmatprep.subr.mxu0 0.0
    %792 = vmatpush1.msra.mxu0 0.0
    %793 = vmatprep.subr.mxu0 0.0
    %794 = vmatpush1.msra.mxu0 0.0
    %795 = vmatprep.subr.mxu0 0.0
    %796 = vmatpush1.msra.mxu0 0.0
    %797 = vmatprep.subr.mxu0 0.0
    %798 = vmatpush1.msra.mxu0 0.0
    %799 = vmatprep.subr.mxu0 0.0
    %800 = vmatpush1.msra.mxu0 0.0
    %801 = vmatprep.subr.mxu0 0.0
    %802 = vmatpush1.msra.mxu0 0.0
    %803 = vmatprep.subr.mxu0 0.0
    %804 = vmatpush1.msra.mxu0 0.0
    %805 = vmatprep.subr.mxu0 0.0
    %806 = vmatpush1.msra.mxu0 0.0
    %807 = vmatprep.subr.mxu0 0.0
    %808 = vmatpush1.msra.mxu0 0.0
    %809 = vmatprep.subr.mxu0 0.0
    %810 = vmatpush1.msra.mxu0 0.0
    %811 = vmatprep.subr.mxu0 0.0
    %812 = vmatpush1.msra.mxu0 0.0
    %813 = vmatprep.subr.mxu0 0.0
    %814 = vmatpush1.msra.mxu0 0.0
    %815 = vmatprep.subr.mxu0 0.0
    %816 = vmatpush1.msra.mxu0 0.0
    %817 = vmatprep.subr.mxu0 0.0
    %818 = vmatpush1.msra.mxu0 0.0
    %819 = vmatprep.subr.mxu0 0.0
    %820 = vmatpush1.msra.mxu0 0.0
    %821 = vmatprep.subr.mxu0 0.0
    %822 = vmatpush1.msra.mxu0 0.0
    %823 = vmatprep.subr.mxu0 0.0
    %824 = vmatpush1.msra.mxu0 0.0
    %825 = vmatprep.subr.mxu0 0.0
    %826 = vmatpush1.msra.mxu0 0.0
    %827 = vmatprep.subr.mxu0 0.0
    %828 = vmatpush1.msra.mxu0 0.0
    %829 = vmatprep.subr.mxu0 0.0
    %830 = vmatpush1.msra.mxu0 0.0
    %831 = vmatprep.subr.mxu0 0.0
    %832 = vmatpush1.msra.mxu0 0.0
    %833 = vmatprep.subr.mxu0 0.0
    %834 = vmatpush1.msra.mxu0 0.0
    %835 = vmatprep.subr.mxu0 0.0
    %836 = vmatpush1.msra.mxu0 0.0
    %837 = vmatprep.mubr.f32.mxu0 0.0
    %838 = vmatmul.mubr.f32.gmra.mrb[0].mxu0 %v631
    %v839 = vpop.f32.mrb[0].mxu0
    %v840 = vadd.f32 %v275, %v839
    %v841 = vpop.f32.mrb[0].mxu0
    %842 = vdwg.mxu0
    %v843 = vadd.f32 %v110, %v700
    %v844 = vxor.u32 %v843, 2147483648
    %v845 = vmul.f32 %v844, 1.442695
    %v846 = vpow.pop %v845
    %v847 = vadd.f32 %v846, 1.0
    %v848 = vrcp.pop %v847
    %v849 = vmul.f32 1.0, %v848
    %851 = vrot.lane.b32.xlu0 %v770, 32
    %v852 = vpop.permute.xlu0 %851
    %v854 = vadd.f32 %v110, %v852
    %v855 = vxor.u32 %v854, 2147483648
    %v856 = vmul.f32 %v855, 1.442695
    %v857 = vpow.pop %v856
    %v858 = vadd.f32 %v857, 1.0
    %v859 = vrcp.pop %v858
    %v860 = vmul.f32 1.0, %v859
    %v861 = vmul.f32 %v849, %v840
    %863 = vrot.lane.b32.xlu0 %v861, 64
    %v864 = vpop.permute.xlu0 %863
    %v866 = vadd.f32 %v110, %v864
    %v867 = vtanh.pop %v866
    %v868 = vsub.f32 1.0, %v860
    %870 = vrot.lane.b32.xlu0 %v867, 96
    %v871 = vpop.permute.xlu0 %870
    %v873 = vmul.f32 %v868, %v871
    %v874 = vmul.f32 %v860, %v627
    %v875 = vadd.f32 %v873, %v874
    %877 = vrot.lane.b32.xlu0 %v875, 96
    %v878 = vpop.permute.xlu0 %877
    %v879 = vsel %vm39, %v878, 0
    %881 = vmatprep.subr.mxu0 0.0
    %882 = vmatpush1.msra.mxu0 %v113
    %883 = vmatprep.subr.mxu0 0.0
    %884 = vmatpush1.msra.mxu0 %v114
    %885 = vmatprep.subr.mxu0 0.0
    %886 = vmatpush1.msra.mxu0 %v115
    %887 = vmatprep.subr.mxu0 0.0
    %888 = vmatpush1.msra.mxu0 %v116
    %889 = vmatprep.subr.mxu0 0.0
    %890 = vmatpush1.msra.mxu0 0.0
    %891 = vmatprep.subr.mxu0 0.0
    %892 = vmatpush1.msra.mxu0 0.0
    %893 = vmatprep.subr.mxu0 0.0
    %894 = vmatpush1.msra.mxu0 0.0
    %895 = vmatprep.subr.mxu0 0.0
    %896 = vmatpush1.msra.mxu0 0.0
    %897 = vmatprep.subr.mxu0 0.0
    %898 = vmatpush1.msra.mxu0 0.0
    %899 = vmatprep.subr.mxu0 0.0
    %900 = vmatpush1.msra.mxu0 0.0
    %901 = vmatprep.subr.mxu0 0.0
    %902 = vmatpush1.msra.mxu0 0.0
    %903 = vmatprep.subr.mxu0 0.0
    %904 = vmatpush1.msra.mxu0 0.0
    %905 = vmatprep.subr.mxu0 0.0
    %906 = vmatpush1.msra.mxu0 0.0
    %907 = vmatprep.subr.mxu0 0.0
    %908 = vmatpush1.msra.mxu0 0.0
    %909 = vmatprep.subr.mxu0 0.0
    %910 = vmatpush1.msra.mxu0 0.0
    %911 = vmatprep.subr.mxu0 0.0
    %912 = vmatpush1.msra.mxu0 0.0
    %913 = vmatprep.subr.mxu0 0.0
    %914 = vmatpush1.msra.mxu0 0.0
    %915 = vmatprep.subr.mxu0 0.0
    %916 = vmatpush1.msra.mxu0 0.0
    %917 = vmatprep.subr.mxu0 0.0
    %918 = vmatpush1.msra.mxu0 0.0
    %919 = vmatprep.subr.mxu0 0.0
    %920 = vmatpush1.msra.mxu0 0.0
    %921 = vmatprep.subr.mxu0 0.0
    %922 = vmatpush1.msra.mxu0 0.0
    %923 = vmatprep.subr.mxu0 0.0
    %924 = vmatpush1.msra.mxu0 0.0
    %925 = vmatprep.subr.mxu0 0.0
    %926 = vmatpush1.msra.mxu0 0.0
    %927 = vmatprep.subr.mxu0 0.0
    %928 = vmatpush1.msra.mxu0 0.0
    %929 = vmatprep.subr.mxu0 0.0
    %930 = vmatpush1.msra.mxu0 0.0
    %931 = vmatprep.subr.mxu0 0.0
    %932 = vmatpush1.msra.mxu0 0.0
    %933 = vmatprep.subr.mxu0 0.0
    %934 = vmatpush1.msra.mxu0 0.0
    %935 = vmatprep.subr.mxu0 0.0
    %936 = vmatpush1.msra.mxu0 0.0
    %937 = vmatprep.subr.mxu0 0.0
    %938 = vmatpush1.msra.mxu0 0.0
    %939 = vmatprep.subr.mxu0 0.0
    %940 = vmatpush1.msra.mxu0 0.0
    %941 = vmatprep.subr.mxu0 0.0
    %942 = vmatpush1.msra.mxu0 0.0
    %943 = vmatprep.subr.mxu0 0.0
    %944 = vmatpush1.msra.mxu0 0.0
    %945 = vmatprep.mubr.f32.mxu0 0.0
    %946 = vmatmul.mubr.f32.gmra.mrb[0].mxu0 %v879
    %v947 = vpop.f32.mrb[0].mxu0
    %v948 = vadd.f32 0.0, %v947
    %v949 = vpop.f32.mrb[0].mxu0
    %950 = vdwg.mxu0
    %951 = vmatprep.subr.mxu0 0.0
    %952 = vmatpush1.msra.mxu0 %v118
    %953 = vmatprep.subr.mxu0 0.0
    %954 = vmatpush1.msra.mxu0 %v119
    %955 = vmatprep.subr.mxu0 0.0
    %956 = vmatpush1.msra.mxu0 %v120
    %957 = vmatprep.subr.mxu0 0.0
    %958 = vmatpush1.msra.mxu0 %v121
    %959 = vmatprep.subr.mxu0 0.0
    %960 = vmatpush1.msra.mxu0 0.0
    %961 = vmatprep.subr.mxu0 0.0
    %962 = vmatpush1.msra.mxu0 0.0
    %963 = vmatprep.subr.mxu0 0.0
    %964 = vmatpush1.msra.mxu0 0.0
    %965 = vmatprep.subr.mxu0 0.0
    %966 = vmatpush1.msra.mxu0 0.0
    %967 = vmatprep.subr.mxu0 0.0
    %968 = vmatpush1.msra.mxu0 0.0
    %969 = vmatprep.subr.mxu0 0.0
    %970 = vmatpush1.msra.mxu0 0.0
    %971 = vmatprep.subr.mxu0 0.0
    %972 = vmatpush1.msra.mxu0 0.0
    %973 = vmatprep.subr.mxu0 0.0
    %974 = vmatpush1.msra.mxu0 0.0
    %975 = vmatprep.subr.mxu0 0.0
    %976 = vmatpush1.msra.mxu0 0.0
    %977 = vmatprep.subr.mxu0 0.0
    %978 = vmatpush1.msra.mxu0 0.0
    %979 = vmatprep.subr.mxu0 0.0
    %980 = vmatpush1.msra.mxu0 0.0
    %981 = vmatprep.subr.mxu0 0.0
    %982 = vmatpush1.msra.mxu0 0.0
    %983 = vmatprep.subr.mxu0 0.0
    %984 = vmatpush1.msra.mxu0 0.0
    %985 = vmatprep.subr.mxu0 0.0
    %986 = vmatpush1.msra.mxu0 0.0
    %987 = vmatprep.subr.mxu0 0.0
    %988 = vmatpush1.msra.mxu0 0.0
    %989 = vmatprep.subr.mxu0 0.0
    %990 = vmatpush1.msra.mxu0 0.0
    %991 = vmatprep.subr.mxu0 0.0
    %992 = vmatpush1.msra.mxu0 0.0
    %993 = vmatprep.subr.mxu0 0.0
    %994 = vmatpush1.msra.mxu0 0.0
    %995 = vmatprep.subr.mxu0 0.0
    %996 = vmatpush1.msra.mxu0 0.0
    %997 = vmatprep.subr.mxu0 0.0
    %998 = vmatpush1.msra.mxu0 0.0
    %999 = vmatprep.subr.mxu0 0.0
    %1000 = vmatpush1.msra.mxu0 0.0
    %1001 = vmatprep.subr.mxu0 0.0
    %1002 = vmatpush1.msra.mxu0 0.0
    %1003 = vmatprep.subr.mxu0 0.0
    %1004 = vmatpush1.msra.mxu0 0.0
    %1005 = vmatprep.subr.mxu0 0.0
    %1006 = vmatpush1.msra.mxu0 0.0
    %1007 = vmatprep.subr.mxu0 0.0
    %1008 = vmatpush1.msra.mxu0 0.0
    %1009 = vmatprep.subr.mxu0 0.0
    %1010 = vmatpush1.msra.mxu0 0.0
    %1011 = vmatprep.subr.mxu0 0.0
    %1012 = vmatpush1.msra.mxu0 0.0
    %1013 = vmatprep.subr.mxu0 0.0
    %1014 = vmatpush1.msra.mxu0 0.0
    %1015 = vmatprep.mubr.f32.mxu0 0.0
    %1016 = vmatmul.mubr.f32.gmra.mrb[0].mxu0 %v879
    %v1017 = vpop.f32.mrb[0].mxu0
    %v1018 = vadd.f32 0.0, %v1017
    %v1019 = vpop.f32.mrb[0].mxu0
    %1020 = vdwg.mxu0
    %1021 = vmatprep.subr.mxu0 0.0
    %1022 = vmatpush1.msra.mxu0 %v123
    %1023 = vmatprep.subr.mxu0 0.0
    %1024 = vmatpush1.msra.mxu0 %v124
    %1025 = vmatprep.subr.mxu0 0.0
    %1026 = vmatpush1.msra.mxu0 %v125
    %1027 = vmatprep.subr.mxu0 0.0
    %1028 = vmatpush1.msra.mxu0 %v126
    %1029 = vmatprep.subr.mxu0 0.0
    %1030 = vmatpush1.msra.mxu0 0.0
    %1031 = vmatprep.subr.mxu0 0.0
    %1032 = vmatpush1.msra.mxu0 0.0
    %1033 = vmatprep.subr.mxu0 0.0
    %1034 = vmatpush1.msra.mxu0 0.0
    %1035 = vmatprep.subr.mxu0 0.0
    %1036 = vmatpush1.msra.mxu0 0.0
    %1037 = vmatprep.subr.mxu0 0.0
    %1038 = vmatpush1.msra.mxu0 0.0
    %1039 = vmatprep.subr.mxu0 0.0
    %1040 = vmatpush1.msra.mxu0 0.0
    %1041 = vmatprep.subr.mxu0 0.0
    %1042 = vmatpush1.msra.mxu0 0.0
    %1043 = vmatprep.subr.mxu0 0.0
    %1044 = vmatpush1.msra.mxu0 0.0
    %1045 = vmatprep.subr.mxu0 0.0
    %1046 = vmatpush1.msra.mxu0 0.0
    %1047 = vmatprep.subr.mxu0 0.0
    %1048 = vmatpush1.msra.mxu0 0.0
    %1049 = vmatprep.subr.mxu0 0.0
    %1050 = vmatpush1.msra.mxu0 0.0
    %1051 = vmatprep.subr.mxu0 0.0
    %1052 = vmatpush1.msra.mxu0 0.0
    %1053 = vmatprep.subr.mxu0 0.0
    %1054 = vmatpush1.msra.mxu0 0.0
    %1055 = vmatprep.subr.mxu0 0.0
    %1056 = vmatpush1.msra.mxu0 0.0
    %1057 = vmatprep.subr.mxu0 0.0
    %1058 = vmatpush1.msra.mxu0 0.0
    %1059 = vmatprep.subr.mxu0 0.0
    %1060 = vmatpush1.msra.mxu0 0.0
    %1061 = vmatprep.subr.mxu0 0.0
    %1062 = vmatpush1.msra.mxu0 0.0
    %1063 = vmatprep.subr.mxu0 0.0
    %1064 = vmatpush1.msra.mxu0 0.0
    %1065 = vmatprep.subr.mxu0 0.0
    %1066 = vmatpush1.msra.mxu0 0.0
    %1067 = vmatprep.subr.mxu0 0.0
    %1068 = vmatpush1.msra.mxu0 0.0
    %1069 = vmatprep.subr.mxu0 0.0
    %1070 = vmatpush1.msra.mxu0 0.0
    %1071 = vmatprep.subr.mxu0 0.0
    %1072 = vmatpush1.msra.mxu0 0.0
    %1073 = vmatprep.subr.mxu0 0.0
    %1074 = vmatpush1.msra.mxu0 0.0
    %1075 = vmatprep.subr.mxu0 0.0
    %1076 = vmatpush1.msra.mxu0 0.0
    %1077 = vmatprep.subr.mxu0 0.0
    %1078 = vmatpush1.msra.mxu0 0.0
    %1079 = vmatprep.subr.mxu0 0.0
    %1080 = vmatpush1.msra.mxu0 0.0
    %1081 = vmatprep.subr.mxu0 0.0
    %1082 = vmatpush1.msra.mxu0 0.0
    %1083 = vmatprep.subr.mxu0 0.0
    %1084 = vmatpush1.msra.mxu0 0.0
    %1085 = vmatprep.mubr.f32.mxu0 0.0
    %1086 = vmatmul.mubr.f32.gmra.mrb[0].mxu0 %v879
    %v1087 = vpop.f32.mrb[0].mxu0
    %v1088 = vadd.f32 %v275, %v1087
    %v1089 = vpop.f32.mrb[0].mxu0
    %1090 = vdwg.mxu0
    %v1091 = vadd.f32 %v110, %v948
    %v1092 = vxor.u32 %v1091, 2147483648
    %v1093 = vmul.f32 %v1092, 1.442695
    %v1094 = vpow.pop %v1093
    %v1095 = vadd.f32 %v1094, 1.0
    %v1096 = vrcp.pop %v1095
    %v1097 = vmul.f32 1.0, %v1096
    %1099 = vrot.lane.b32.xlu0 %v1018, 32
    %v1100 = vpop.permute.xlu0 %1099
    %v1102 = vadd.f32 %v110, %v1100
    %v1103 = vxor.u32 %v1102, 2147483648
    %v1104 = vmul.f32 %v1103, 1.442695
    %v1105 = vpow.pop %v1104
    %v1106 = vadd.f32 %v1105, 1.0
    %v1107 = vrcp.pop %v1106
    %v1108 = vmul.f32 1.0, %v1107
    %v1109 = vmul.f32 %v1097, %v1088
    %1111 = vrot.lane.b32.xlu0 %v1109, 64
    %v1112 = vpop.permute.xlu0 %1111
    %v1114 = vadd.f32 %v110, %v1112
    %v1115 = vtanh.pop %v1114
    %v1116 = vsub.f32 1.0, %v1108
    %1118 = vrot.lane.b32.xlu0 %v1115, 96
    %v1119 = vpop.permute.xlu0 %1118
    %v1121 = vmul.f32 %v1116, %v1119
    %v1122 = vmul.f32 %v1108, %v875
    %v1123 = vadd.f32 %v1121, %v1122
    %1125 = vrot.lane.b32.xlu0 %v875, 32
    %v1126 = vpop.permute.xlu0 %1125
    %1129 = vrot.lane.b32.xlu0 %v1123, 64
    %v1130 = vpop.permute.xlu0 %1129
    %v1132 = vsel %vm39, %v382, %v627
    %vm1133 = vcmask 523264
    %v1134 = vsel %vm1133, %v1132, %v1126
    %vm1135 = vcmask 785408
    %v1136 = vsel %vm1135, %v1134, %v1130
    %v1137 = vld [vmem:[%s5] sm:$0xff]
    %v1138 = vld [vmem:[%s5 + $0x8] sm:$0xff]
    %v1139 = vld [vmem:[%s5 + $0x10] sm:$0xff]
    %v1140 = vld [vmem:[%s5 + $0x18] sm:$0xff]
    %v1141 = vld [vmem:[%s5 + $0x20] sm:$0xff]
    %v1142 = vld [vmem:[%s5 + $0x28] sm:$0xff]
    %v1143 = vld [vmem:[%s5 + $0x30] sm:$0xff]
    %v1144 = vld [vmem:[%s5 + $0x38] sm:$0xff]
    %v1145 = vld [vmem:[%s5 + $0x40] sm:$0xff]
    %v1146 = vld [vmem:[%s5 + $0x48] sm:$0xff]
    %v1147 = vld [vmem:[%s5 + $0x50] sm:$0xff]
    %v1148 = vld [vmem:[%s5 + $0x58] sm:$0xff]
    %v1149 = vld [vmem:[%s5 + $0x60] sm:$0xff]
    %v1150 = vld [vmem:[%s5 + $0x68] sm:$0xff]
    %v1151 = vld [vmem:[%s5 + $0x70] sm:$0xff]
    %v1152 = vld [vmem:[%s5 + $0x78] sm:$0xff]
    %v1153 = vld [vmem:[%s6] sm:$0x1]
    %v1155 = vlaneseq
    %v1156 = vshrl.u32 %v1155, 7
    %v1157 = vsub.s32 0, %v1156
    %v1158 = vrot.slane %v1153, %v1157
    %1160 = vmatprep.subr.mxu0 0.0
    %1161 = vmatpush1.msra.mxu0 %v1137
    %1162 = vmatprep.subr.mxu0 0.0
    %1163 = vmatpush1.msra.mxu0 %v1138
    %1164 = vmatprep.subr.mxu0 0.0
    %1165 = vmatpush1.msra.mxu0 %v1139
    %1166 = vmatprep.subr.mxu0 0.0
    %1167 = vmatpush1.msra.mxu0 %v1140
    %1168 = vmatprep.subr.mxu0 0.0
    %1169 = vmatpush1.msra.mxu0 %v1141
    %1170 = vmatprep.subr.mxu0 0.0
    %1171 = vmatpush1.msra.mxu0 %v1142
    %1172 = vmatprep.subr.mxu0 0.0
    %1173 = vmatpush1.msra.mxu0 %v1143
    %1174 = vmatprep.subr.mxu0 0.0
    %1175 = vmatpush1.msra.mxu0 %v1144
    %1176 = vmatprep.subr.mxu0 0.0
    %1177 = vmatpush1.msra.mxu0 %v1145
    %1178 = vmatprep.subr.mxu0 0.0
    %1179 = vmatpush1.msra.mxu0 %v1146
    %1180 = vmatprep.subr.mxu0 0.0
    %1181 = vmatpush1.msra.mxu0 %v1147
    %1182 = vmatprep.subr.mxu0 0.0
    %1183 = vmatpush1.msra.mxu0 %v1148
    %1184 = vmatprep.subr.mxu0 0.0
    %1185 = vmatpush1.msra.mxu0 %v1149
    %1186 = vmatprep.subr.mxu0 0.0
    %1187 = vmatpush1.msra.mxu0 %v1150
    %1188 = vmatprep.subr.mxu0 0.0
    %1189 = vmatpush1.msra.mxu0 %v1151
    %1190 = vmatprep.subr.mxu0 0.0
    %1191 = vmatpush1.msra.mxu0 %v1152
    %1192 = vmatprep.subr.mxu0 0.0
    %1193 = vmatpush1.msra.mxu0 0.0
    %1194 = vmatprep.subr.mxu0 0.0
    %1195 = vmatpush1.msra.mxu0 0.0
    %1196 = vmatprep.subr.mxu0 0.0
    %1197 = vmatpush1.msra.mxu0 0.0
    %1198 = vmatprep.subr.mxu0 0.0
    %1199 = vmatpush1.msra.mxu0 0.0
    %1200 = vmatprep.subr.mxu0 0.0
    %1201 = vmatpush1.msra.mxu0 0.0
    %1202 = vmatprep.subr.mxu0 0.0
    %1203 = vmatpush1.msra.mxu0 0.0
    %1204 = vmatprep.subr.mxu0 0.0
    %1205 = vmatpush1.msra.mxu0 0.0
    %1206 = vmatprep.subr.mxu0 0.0
    %1207 = vmatpush1.msra.mxu0 0.0
    %1208 = vmatprep.subr.mxu0 0.0
    %1209 = vmatpush1.msra.mxu0 0.0
    %1210 = vmatprep.subr.mxu0 0.0
    %1211 = vmatpush1.msra.mxu0 0.0
    %1212 = vmatprep.subr.mxu0 0.0
    %1213 = vmatpush1.msra.mxu0 0.0
    %1214 = vmatprep.subr.mxu0 0.0
    %1215 = vmatpush1.msra.mxu0 0.0
    %1216 = vmatprep.subr.mxu0 0.0
    %1217 = vmatpush1.msra.mxu0 0.0
    %1218 = vmatprep.subr.mxu0 0.0
    %1219 = vmatpush1.msra.mxu0 0.0
    %1220 = vmatprep.subr.mxu0 0.0
    %1221 = vmatpush1.msra.mxu0 0.0
    %1222 = vmatprep.subr.mxu0 0.0
    %1223 = vmatpush1.msra.mxu0 0.0
    %1224 = vmatprep.mubr.f32.mxu0 0.0
    %1225 = vmatmul.mubr.f32.gmra.mrb[0].mxu0 %v1136
    %v1226 = vpop.f32.mrb[0].mxu0
    %v1227 = vadd.f32 %v1158, %v1226
    %v1228 = vpop.f32.mrb[0].mxu0
    %1229 = vdwg.mxu0
    %vm1230 = vcmask 60416
    %1231 = vst.msk [vmem:[#allocation2] sm:$0xf] %vm1230, %v1227
    // Predicated region
    $region30: #{tpu_custom_call.1} parent=1 // pred_check
      _
    $region31: #{tpu_custom_call.1} parent=1 // pred_check_branch
      %1233 = sbr.rel (0) target = $region33
    $region32: #{tpu_custom_call.1} parent=1 // pred_region
      %s1235 = ssub.s32 64, 64
      %1236 = vsyncadd [#allocation3], %s1235
      %s1238 = sshll.u32 [#allocation2], 4
      %s1239 = int_to_ptr.vmem [resolvable:$true] %s1238
      %1241 = dma.vmem_to_hbm [thread:$0]  %s1239, 64, %s7, [#allocation3]
    $region33: #{tpu_custom_call.1} parent=1 // pred_fallthru
      _
    // Predicated region
    $region34: #{tpu_custom_call.1} parent=1 // pred_check
      _
    $region35: #{tpu_custom_call.1} parent=1 // pred_check_branch
      %1243 = sbr.rel (0) target = $region37
    $region36: #{tpu_custom_call.1} parent=1 // pred_region
      %1244 = dma.done [#allocation3], 64
    $region37: #{tpu_custom_call.1} parent=1 // pred_fallthru
      _
    %1245 = vsyncpa [#allocation3], 1

</llo_original>
